<compile_context>
chip_gen: v6e
topology: v6e:2x2x1
jax: 0.10.0
libtpu: 0.0.40
codegen_flags: <defaults>
</compile_context>

<pallas_src>
import functools

import jax
import jax.numpy as jnp
from jax import lax
from jax.experimental import pallas as pl
from jax.experimental.pallas import tpu as pltpu


_LANE = 128
_FUSED_VMEM_BUDGET = 40 * 1024 * 1024   # stay well inside v7x's 64 MiB VMEM


def _round_up(n, m):
    return ((n + m - 1) // m) * m


def _clamp_vmem_limit(est_bytes):
    # Explicit scoped-VMEM limit: headroom over the estimate, never above what
    # v7x (64 MiB physical) can reasonably grant.
    return int(min(max(est_bytes * 6 // 5, 32 * 1024 * 1024), 48 * 1024 * 1024))


def _layernorm(y, gamma, beta, d_real, d_pad, eps):
    """LayerNorm over the last axis of f32 `y`, masked to the first d_real lanes.

    Padded lanes of `y` are exactly 0 (zero weight columns / zero bias) and
    gamma/beta are zero-padded, so padded output lanes come out exactly 0.
    """
    if d_pad != d_real:
        lane = lax.broadcasted_iota(jnp.int32, (1, d_pad), 1)
        mask = (lane < d_real).astype(y.dtype)
        inv_n = jnp.float32(1.0 / d_real)
        mean = jnp.sum(y, axis=-1, keepdims=True) * inv_n
        centered = (y - mean) * mask
        var = jnp.sum(centered * centered, axis=-1, keepdims=True) * inv_n
    else:
        mean = jnp.mean(y, axis=-1, keepdims=True)
        centered = y - mean
        var = jnp.mean(centered * centered, axis=-1, keepdims=True)
    return centered * lax.rsqrt(var + eps) * gamma + beta


# --------------------------------------------------------------------------
# Fused whole-MLP kernel (all layers in one pallas_call, batch-tiled grid).
# --------------------------------------------------------------------------
def _fused_mlp_kernel(*refs, layer_meta, eps, compute_dtype):
    # refs = (x_ref, [w, b, (gamma, beta)?] * depth, o_ref)
    x_ref = refs[0]
    o_ref = refs[-1]
    idx = 1
    n_layers = len(layer_meta)
    h = x_ref[...].astype(compute_dtype)
    for k, (has_ln, d_real, d_pad) in enumerate(layer_meta):
        w_ref, b_ref = refs[idx], refs[idx + 1]
        idx += 2
        y = jnp.dot(h, w_ref[...], preferred_element_type=jnp.float32)
        y = y + b_ref[...]
        if k == n_layers - 1:
            o_ref[...] = y.astype(o_ref.dtype)
        else:
            if has_ln:
                g_ref, bt_ref = refs[idx], refs[idx + 1]
                idx += 2
                y = _layernorm(y, g_ref[...], bt_ref[...], d_real, d_pad, eps)
            y = jnp.maximum(y, 0.0)
            # Dropout(p=0.0) == identity in inference.
            h = y.astype(compute_dtype)


# --------------------------------------------------------------------------
# Per-layer fallback kernel: (batch, K) grid, f32 VMEM accumulator.
# --------------------------------------------------------------------------
def _layer_kernel(*refs, has_ln, is_last, d_real, d_pad, eps):
    x_ref, w_ref, b_ref = refs[0], refs[1], refs[2]
    if has_ln:
        g_ref, bt_ref, o_ref, acc_ref = refs[3], refs[4], refs[5], refs[6]
    else:
        g_ref = bt_ref = None
        o_ref, acc_ref = refs[3], refs[4]

    k = pl.program_id(1)

    @pl.when(k == 0)
    def _init():
        acc_ref[...] = jnp.zeros_like(acc_ref)

    acc_ref[...] += jnp.dot(x_ref[...], w_ref[...],
                            preferred_element_type=jnp.float32)

    @pl.when(k == pl.num_programs(1) - 1)
    def _finalize():
        y = acc_ref[...] + b_ref[...]
        if not is_last:
            if has_ln:
                y = _layernorm(y, g_ref[...], bt_ref[...], d_real, d_pad, eps)
            y = jnp.maximum(y, 0.0)
            # Dropout(p=0.0) == identity in inference.
        o_ref[...] = y.astype(o_ref.dtype)


# --------------------------------------------------------------------------
# Wrappers.
# --------------------------------------------------------------------------
def _fused_vmem_estimate(params, tm, d_in_pad, compute_dtype, out_dtype):
    c = jnp.dtype(compute_dtype).itemsize
    o = jnp.dtype(out_dtype).itemsize
    w_bytes = sum(l["w_t"].size * c for l in params)
    small = sum(3 * l["b"].size * 4 for l in params)
    d_out_last = params[-1]["w_t"].shape[1]
    max_pad = max([d_in_pad] + [l["w_t"].shape[1] for l in params])
    est = 2 * (w_bytes + small + tm * d_in_pad * c + tm * d_out_last * o)
    est += 6 * tm * max_pad * 4          # f32 epilogue temporaries headroom
    return est


def _mlp_fused(xp, params, *, tm, compute_dtype, eps, out_dtype):
    B_pad, d_in_pad = xp.shape
    n_layers = len(params)
    d_out_pad_last = params[-1]["w_t"].shape[1]
    c_itemsize = jnp.dtype(compute_dtype).itemsize
    o_itemsize = jnp.dtype(out_dtype).itemsize

    in_arrays = [xp]
    in_specs = [pl.BlockSpec((tm, d_in_pad), lambda i: (i, 0))]
    layer_meta = []
    flops = 0
    bytes_accessed = B_pad * d_in_pad * c_itemsize + B_pad * d_out_pad_last * o_itemsize
    for k, layer in enumerate(params):
        w = layer["w_t"].astype(compute_dtype)
        dk_in, dk_out = w.shape
        in_arrays += [w, layer["b"]]
        in_specs += [pl.BlockSpec((dk_in, dk_out), lambda i: (0, 0)),
                     pl.BlockSpec((1, dk_out), lambda i: (0, 0))]
        has_ln = ("gamma" in layer) and (k < n_layers - 1)
        if has_ln:
            in_arrays += [layer["gamma"], layer["beta"]]
            in_specs += [pl.BlockSpec((1, dk_out), lambda i: (0, 0)),
                         pl.BlockSpec((1, dk_out), lambda i: (0, 0))]
        layer_meta.append((has_ln, layer["d_out"], dk_out))
        flops += 2 * B_pad * dk_in * dk_out
        bytes_accessed += w.size * c_itemsize + 4 * dk_out * (3 if has_ln else 1)

    kernel = functools.partial(_fused_mlp_kernel, layer_meta=tuple(layer_meta),
                               eps=eps, compute_dtype=compute_dtype)
    est = _fused_vmem_estimate(params, tm, d_in_pad, compute_dtype, out_dtype)

    return pl.pallas_call(
        kernel,
        out_shape=jax.ShapeDtypeStruct((B_pad, d_out_pad_last), out_dtype),
        grid=(B_pad // tm,),
        in_specs=in_specs,
        out_specs=pl.BlockSpec((tm, d_out_pad_last), lambda i: (i, 0)),
        compiler_params=pltpu.CompilerParams(
            dimension_semantics=("parallel",),
            vmem_limit_bytes=_clamp_vmem_limit(est)),
        cost_estimate=pl.CostEstimate(
            flops=int(flops),
            transcendentals=int(B_pad * max(n_layers - 1, 0)),
            bytes_accessed=int(bytes_accessed)),
    )(*in_arrays)


def _mlp_per_layer(xp, params, *, tm, compute_dtype, eps, out_dtype):
    h = xp
    n_layers = len(params)
    for k, layer in enumerate(params):
        is_last = (k == n_layers - 1)
        has_ln = ("gamma" in layer) and not is_last
        w = layer["w_t"].astype(compute_dtype)
        d_in_pad, d_out_pad = w.shape
        B_pad = h.shape[0]
        c_itemsize = jnp.dtype(compute_dtype).itemsize
        layer_out_dtype = out_dtype if is_last else compute_dtype
        o_itemsize = jnp.dtype(layer_out_dtype).itemsize

        # K tile: 256-aligned fills the v6e/v7x 256x256 MXU; 128 suffices on v5e.
        if d_in_pad % 512 == 0:
            tk = 512
        elif d_in_pad % 256 == 0:
            tk = 256
        else:
            tk = 128
        grid = (B_pad // tm, d_in_pad // tk)

        in_arrays = [h, w, layer["b"]]
        in_specs = [pl.BlockSpec((tm, tk), lambda m, kk: (m, kk)),
                    pl.BlockSpec((tk, d_out_pad), lambda m, kk: (kk, 0)),
                    pl.BlockSpec((1, d_out_pad), lambda m, kk: (0, 0))]
        if has_ln:
            in_arrays += [layer["gamma"], layer["beta"]]
            in_specs += [pl.BlockSpec((1, d_out_pad), lambda m, kk: (0, 0)),
                         pl.BlockSpec((1, d_out_pad), lambda m, kk: (0, 0))]

        kernel = functools.partial(_layer_kernel, has_ln=has_ln, is_last=is_last,
                                   d_real=layer["d_out"], d_pad=d_out_pad, eps=eps)

        est = (2 * (tm * tk * c_itemsize + tk * d_out_pad * c_itemsize
                    + tm * d_out_pad * o_itemsize)
               + tm * d_out_pad * 4          # accumulator scratch
               + 4 * tm * d_out_pad * 4)     # epilogue temporaries headroom

        h = pl.pallas_call(
            kernel,
            out_shape=jax.ShapeDtypeStruct((B_pad, d_out_pad), layer_out_dtype),
            grid=grid,
            in_specs=in_specs,
            out_specs=pl.BlockSpec((tm, d_out_pad), lambda m, kk: (m, 0)),
            scratch_shapes=[pltpu.VMEM((tm, d_out_pad), jnp.float32)],
            compiler_params=pltpu.CompilerParams(
                dimension_semantics=("parallel", "arbitrary"),
                vmem_limit_bytes=_clamp_vmem_limit(est)),
            cost_estimate=pl.CostEstimate(
                flops=int(2 * B_pad * d_in_pad * d_out_pad),
                transcendentals=int(B_pad if has_ln else 0),
                bytes_accessed=int(h.size * h.dtype.itemsize
                                   + w.size * c_itemsize
                                   + B_pad * d_out_pad * o_itemsize)),
        )(*in_arrays)
    return h


def init_mlp_params(key, input_dim, hidden_dim, depth=1, ln=True):
    """nn.Linear default init (uniform +-1/sqrt(fan_in)); nn.LayerNorm defaults.
    Weights are stored pre-transposed [in, out] and zero-padded to lane multiples
    of 128 so the kernel tiles are lane-dense."""
    params = []
    d_in = input_dim
    for k in range(depth):
        key, kw, kb = jax.random.split(key, 3)
        d_out = hidden_dim
        bound = 1.0 / (d_in ** 0.5)
        w = jax.random.uniform(kw, (d_out, d_in), jnp.float32, -bound, bound)
        b = jax.random.uniform(kb, (d_out,), jnp.float32, -bound, bound)
        d_in_pad = _round_up(d_in, _LANE)
        d_out_pad = _round_up(d_out, _LANE)
        layer = {
            "w_t": jnp.zeros((d_in_pad, d_out_pad), jnp.float32).at[:d_in, :d_out].set(w.T),
            "b": jnp.zeros((1, d_out_pad), jnp.float32).at[:, :d_out].set(b),
            "d_in": d_in,
            "d_out": d_out,
        }
        is_last = (k == depth - 1)
        if ln and not is_last:
            layer["gamma"] = jnp.zeros((1, d_out_pad), jnp.float32).at[:, :d_out].set(1.0)
            layer["beta"] = jnp.zeros((1, d_out_pad), jnp.float32)
        params.append(layer)
        d_in = d_out
    return params


def mlp_forward(x, params, *, compute_dtype=jnp.float32, eps=1e-5,
                out_dtype=jnp.float32, force_per_layer=False):
    """MLP forward: depth x Linear, with LayerNorm+ReLU(+Dropout p=0) after every
    layer except the last.  compute_dtype=jnp.bfloat16 runs the matmuls in bf16
    on the MXU with f32 accumulation/epilogue."""
    B, d_in = x.shape
    assert d_in == params[0]["d_in"], (d_in, params[0]["d_in"])
    d_in_pad = params[0]["w_t"].shape[0]
    d_out_final = params[-1]["d_out"]

    b8 = _round_up(max(B, 8), 8)
    tm = b8 if b8 <= 256 else 256            # batch tile: multiple of 8, <= 256 rows
    B_pad = _round_up(b8, tm)

    xp = jnp.zeros((B_pad, d_in_pad), compute_dtype)
    xp = xp.at[:B, :d_in].set(x.astype(compute_dtype))

    est = _fused_vmem_estimate(params, tm, d_in_pad, compute_dtype, out_dtype)
    if force_per_layer or est > _FUSED_VMEM_BUDGET:
        out = _mlp_per_layer(xp, params, tm=tm, compute_dtype=compute_dtype,
                             eps=eps, out_dtype=out_dtype)
    else:
        out = _mlp_fused(xp, params, tm=tm, compute_dtype=compute_dtype,
                         eps=eps, out_dtype=out_dtype)
    return out[:B, :d_out_final]


def _reference_forward(x, params, *, compute_dtype=jnp.float32, eps=1e-5):
    depth = len(params)
    h = x.astype(compute_dtype)
    for k, layer in enumerate(params):
        d_in, d_out = layer["d_in"], layer["d_out"]
        w = layer["w_t"][:d_in, :d_out].astype(compute_dtype)
        b = layer["b"][0, :d_out]
        y = jnp.dot(h, w, preferred_element_type=jnp.float32) + b
        if k < depth - 1:
            if "gamma" in layer:
                g = layer["gamma"][0, :d_out]
                bt = layer["beta"][0, :d_out]
                mean = jnp.mean(y, axis=-1, keepdims=True)
                var = jnp.mean((y - mean) ** 2, axis=-1, keepdims=True)
                y = (y - mean) * lax.rsqrt(var + eps) * g + bt
            y = jnp.maximum(y, 0.0)
            h = y.astype(compute_dtype)
        else:
            h = y
    return h


if __name__ == "__main__":
    key = jax.random.PRNGKey(0)
    B, input_dim, hidden_dim, depth = 8, 16, 32, 3

    kx, kp, kp2 = jax.random.split(key, 3)
    x = jax.random.normal(kx, (B, input_dim), jnp.float32)
    params = init_mlp_params(kp, input_dim, hidden_dim, depth, ln=True)

    # 1) f32, fused whole-MLP kernel.
    out = jax.block_until_ready(mlp_forward(x, params, compute_dtype=jnp.float32))
    ref = _reference_forward(x, params, compute_dtype=jnp.float32)
    assert out.shape == (B, hidden_dim), out.shape
    assert jnp.allclose(out, ref, atol=1e-4, rtol=1e-4), float(jnp.max(jnp.abs(out - ref)))

    # 2) f32, forced per-layer fallback (batch x K grid + VMEM accumulator).
    out_pl = jax.block_until_ready(
        mlp_forward(x, params, compute_dtype=jnp.float32, force_per_layer=True))
    assert jnp.allclose(out_pl, ref, atol=1e-4, rtol=1e-4), \
        float(jnp.max(jnp.abs(out_pl - ref)))

    # 3) bf16 MXU path (f32 accumulation / LayerNorm), fused kernel.
    out_bf = jax.block_until_ready(mlp_forward(x, params, compute_dtype=jnp.bfloat16))
    ref_bf = _reference_forward(x, params, compute_dtype=jnp.bfloat16)
    assert jnp.allclose(out_bf, ref_bf, atol=2e-2, rtol=2e-2), \
        float(jnp.max(jnp.abs(out_bf - ref_bf)))

    # 4) ln=False, depth=2 variant (Linear -> ReLU -> Linear).
    params_noln = init_mlp_params(kp2, input_dim, hidden_dim, 2, ln=False)
    out_noln = jax.block_until_ready(mlp_forward(x, params_noln, compute_dtype=jnp.float32))
    ref_noln = _reference_forward(x, params_noln, compute_dtype=jnp.float32)
    assert jnp.allclose(out_noln, ref_noln, atol=1e-4, rtol=1e-4), \
        float(jnp.max(jnp.abs(out_noln - ref_noln)))

    print("KERNEL_OK")
</pallas_src>

<mosaic_0001>
module attributes {stable_mosaic.version = 11 : i64} {
  func.func @_fused_mlp_kernel(%arg0: i32, %arg1: memref<8x128xf32, #tpu.memory_space<vmem>>, %arg2: memref<128x128xf32, #tpu.memory_space<vmem>>, %arg3: memref<1x128xf32, #tpu.memory_space<vmem>>, %arg4: memref<1x128xf32, #tpu.memory_space<vmem>>, %arg5: memref<1x128xf32, #tpu.memory_space<vmem>>, %arg6: memref<128x128xf32, #tpu.memory_space<vmem>>, %arg7: memref<1x128xf32, #tpu.memory_space<vmem>>, %arg8: memref<1x128xf32, #tpu.memory_space<vmem>>, %arg9: memref<1x128xf32, #tpu.memory_space<vmem>>, %arg10: memref<128x128xf32, #tpu.memory_space<vmem>>, %arg11: memref<1x128xf32, #tpu.memory_space<vmem>>, %arg12: memref<8x128xf32, #tpu.memory_space<vmem>>) attributes {dimension_semantics = [#tpu.dimension_semantics<parallel>], iteration_bounds = array<i64: 1>, scalar_prefetch = 0 : i64, scratch_operands = 0 : i64, tpu.core_type = #tpu.core_type<tc>, window_params = [{transform_indices = @transform_0, window_bounds = array<i64: 8, 128>}, {pipeline_mode = #tpu.pipeline_mode<synchronous>, transform_indices = @transform_1, window_bounds = array<i64: 128, 128>}, {pipeline_mode = #tpu.pipeline_mode<synchronous>, transform_indices = @transform_2, window_bounds = array<i64: 1, 128>}, {pipeline_mode = #tpu.pipeline_mode<synchronous>, transform_indices = @transform_3, window_bounds = array<i64: 1, 128>}, {pipeline_mode = #tpu.pipeline_mode<synchronous>, transform_indices = @transform_4, window_bounds = array<i64: 1, 128>}, {pipeline_mode = #tpu.pipeline_mode<synchronous>, transform_indices = @transform_5, window_bounds = array<i64: 128, 128>}, {pipeline_mode = #tpu.pipeline_mode<synchronous>, transform_indices = @transform_6, window_bounds = array<i64: 1, 128>}, {pipeline_mode = #tpu.pipeline_mode<synchronous>, transform_indices = @transform_7, window_bounds = array<i64: 1, 128>}, {pipeline_mode = #tpu.pipeline_mode<synchronous>, transform_indices = @transform_8, window_bounds = array<i64: 1, 128>}, {pipeline_mode = #tpu.pipeline_mode<synchronous>, transform_indices = @transform_9, window_bounds = array<i64: 128, 128>}, {pipeline_mode = #tpu.pipeline_mode<synchronous>, transform_indices = @transform_10, window_bounds = array<i64: 1, 128>}, {transform_indices = @transform_11, window_bounds = array<i64: 8, 128>}]} {
    %c0 = arith.constant 0 : index
    %c0_0 = arith.constant 0 : index
    %0 = vector.load %arg1[%c0, %c0_0] : memref<8x128xf32, #tpu.memory_space<vmem>>, vector<8x128xf32>
    %c0_1 = arith.constant 0 : index
    %c0_2 = arith.constant 0 : index
    %1 = vector.load %arg2[%c0_1, %c0_2] : memref<128x128xf32, #tpu.memory_space<vmem>>, vector<128x128xf32>
    %cst = arith.constant dense<0.000000e+00> : vector<8x128xf32>
    %2 = tpu.matmul %0, %1, %cst {dimension_numbers = #tpu.dot_dimension_numbers<[1], [0], [0], [1], [0, 0, 1, 1], [], []>} : vector<8x128xf32>, vector<128x128xf32>, vector<8x128xf32> -> vector<8x128xf32>
    %c0_3 = arith.constant 0 : index
    %c0_4 = arith.constant 0 : index
    %3 = vector.load %arg3[%c0_3, %c0_4] : memref<1x128xf32, #tpu.memory_space<vmem>>, vector<1x128xf32>
    %4 = vector.broadcast %3 : vector<1x128xf32> to vector<8x128xf32>
    %5 = arith.addf %2, %4 : vector<8x128xf32>
    %c0_5 = arith.constant 0 : index
    %c0_6 = arith.constant 0 : index
    %6 = vector.load %arg4[%c0_5, %c0_6] : memref<1x128xf32, #tpu.memory_space<vmem>>, vector<1x128xf32>
    %c0_7 = arith.constant 0 : index
    %c0_8 = arith.constant 0 : index
    %7 = vector.load %arg5[%c0_7, %c0_8] : memref<1x128xf32, #tpu.memory_space<vmem>>, vector<1x128xf32>
    %8 = tpu.iota {dimensions = array<i32: 1>} : vector<1x128xi32>
    %c32_i32 = arith.constant 32 : i32
    %9 = vector.broadcast %c32_i32 : i32 to vector<1x128xi32>
    %10 = arith.cmpi slt, %8, %9 : vector<1x128xi32>
    %11 = arith.extui %10 : vector<1x128xi1> to vector<1x128xi32>
    %12 = arith.sitofp %11 : vector<1x128xi32> to vector<1x128xf32>
    %cst_9 = arith.constant dense<0.000000e+00> : vector<8xf32>
    %13 = vector.multi_reduction <add>, %5, %cst_9 [1] : vector<8x128xf32> to vector<8xf32>
    %14 = vector.shape_cast %13 : vector<8xf32> to vector<8x1xf32>
    %cst_10 = arith.constant 3.125000e-02 : f32
    %15 = vector.broadcast %cst_10 : f32 to vector<8x1xf32>
    %16 = arith.mulf %14, %15 : vector<8x1xf32>
    %17 = vector.broadcast %16 : vector<8x1xf32> to vector<8x128xf32>
    %18 = arith.subf %5, %17 : vector<8x128xf32>
    %19 = vector.broadcast %12 : vector<1x128xf32> to vector<8x128xf32>
    %20 = arith.mulf %18, %19 : vector<8x128xf32>
    %21 = arith.mulf %20, %20 : vector<8x128xf32>
    %cst_11 = arith.constant dense<0.000000e+00> : vector<8xf32>
    %22 = vector.multi_reduction <add>, %21, %cst_11 [1] : vector<8x128xf32> to vector<8xf32>
    %23 = vector.shape_cast %22 : vector<8xf32> to vector<8x1xf32>
    %cst_12 = arith.constant 3.125000e-02 : f32
    %24 = vector.broadcast %cst_12 : f32 to vector<8x1xf32>
    %25 = arith.mulf %23, %24 : vector<8x1xf32>
    %cst_13 = arith.constant 9.99999974E-6 : f32
    %26 = vector.broadcast %cst_13 : f32 to vector<8x1xf32>
    %27 = arith.addf %25, %26 : vector<8x1xf32>
    %28 = math.rsqrt %27 : vector<8x1xf32>
    %29 = vector.broadcast %28 : vector<8x1xf32> to vector<8x128xf32>
    %30 = arith.mulf %20, %29 : vector<8x128xf32>
    %31 = vector.broadcast %6 : vector<1x128xf32> to vector<8x128xf32>
    %32 = arith.mulf %30, %31 : vector<8x128xf32>
    %33 = vector.broadcast %7 : vector<1x128xf32> to vector<8x128xf32>
    %34 = arith.addf %32, %33 : vector<8x128xf32>
    %cst_14 = arith.constant 0.000000e+00 : f32
    %35 = vector.broadcast %cst_14 : f32 to vector<8x128xf32>
    %36 = arith.maximumf %34, %35 : vector<8x128xf32>
    %c0_15 = arith.constant 0 : index
    %c0_16 = arith.constant 0 : index
    %37 = vector.load %arg6[%c0_15, %c0_16] : memref<128x128xf32, #tpu.memory_space<vmem>>, vector<128x128xf32>
    %cst_17 = arith.constant dense<0.000000e+00> : vector<8x128xf32>
    %38 = tpu.matmul %36, %37, %cst_17 {dimension_numbers = #tpu.dot_dimension_numbers<[1], [0], [0], [1], [0, 0, 1, 1], [], []>} : vector<8x128xf32>, vector<128x128xf32>, vector<8x128xf32> -> vector<8x128xf32>
    %c0_18 = arith.constant 0 : index
    %c0_19 = arith.constant 0 : index
    %39 = vector.load %arg7[%c0_18, %c0_19] : memref<1x128xf32, #tpu.memory_space<vmem>>, vector<1x128xf32>
    %40 = vector.broadcast %39 : vector<1x128xf32> to vector<8x128xf32>
    %41 = arith.addf %38, %40 : vector<8x128xf32>
    %c0_20 = arith.constant 0 : index
    %c0_21 = arith.constant 0 : index
    %42 = vector.load %arg8[%c0_20, %c0_21] : memref<1x128xf32, #tpu.memory_space<vmem>>, vector<1x128xf32>
    %c0_22 = arith.constant 0 : index
    %c0_23 = arith.constant 0 : index
    %43 = vector.load %arg9[%c0_22, %c0_23] : memref<1x128xf32, #tpu.memory_space<vmem>>, vector<1x128xf32>
    %44 = tpu.iota {dimensions = array<i32: 1>} : vector<1x128xi32>
    %c32_i32_24 = arith.constant 32 : i32
    %45 = vector.broadcast %c32_i32_24 : i32 to vector<1x128xi32>
    %46 = arith.cmpi slt, %44, %45 : vector<1x128xi32>
    %47 = arith.extui %46 : vector<1x128xi1> to vector<1x128xi32>
    %48 = arith.sitofp %47 : vector<1x128xi32> to vector<1x128xf32>
    %cst_25 = arith.constant dense<0.000000e+00> : vector<8xf32>
    %49 = vector.multi_reduction <add>, %41, %cst_25 [1] : vector<8x128xf32> to vector<8xf32>
    %50 = vector.shape_cast %49 : vector<8xf32> to vector<8x1xf32>
    %cst_26 = arith.constant 3.125000e-02 : f32
    %51 = vector.broadcast %cst_26 : f32 to vector<8x1xf32>
    %52 = arith.mulf %50, %51 : vector<8x1xf32>
    %53 = vector.broadcast %52 : vector<8x1xf32> to vector<8x128xf32>
    %54 = arith.subf %41, %53 : vector<8x128xf32>
    %55 = vector.broadcast %48 : vector<1x128xf32> to vector<8x128xf32>
    %56 = arith.mulf %54, %55 : vector<8x128xf32>
    %57 = arith.mulf %56, %56 : vector<8x128xf32>
    %cst_27 = arith.constant dense<0.000000e+00> : vector<8xf32>
    %58 = vector.multi_reduction <add>, %57, %cst_27 [1] : vector<8x128xf32> to vector<8xf32>
    %59 = vector.shape_cast %58 : vector<8xf32> to vector<8x1xf32>
    %cst_28 = arith.constant 3.125000e-02 : f32
    %60 = vector.broadcast %cst_28 : f32 to vector<8x1xf32>
    %61 = arith.mulf %59, %60 : vector<8x1xf32>
    %cst_29 = arith.constant 9.99999974E-6 : f32
    %62 = vector.broadcast %cst_29 : f32 to vector<8x1xf32>
    %63 = arith.addf %61, %62 : vector<8x1xf32>
    %64 = math.rsqrt %63 : vector<8x1xf32>
    %65 = vector.broadcast %64 : vector<8x1xf32> to vector<8x128xf32>
    %66 = arith.mulf %56, %65 : vector<8x128xf32>
    %67 = vector.broadcast %42 : vector<1x128xf32> to vector<8x128xf32>
    %68 = arith.mulf %66, %67 : vector<8x128xf32>
    %69 = vector.broadcast %43 : vector<1x128xf32> to vector<8x128xf32>
    %70 = arith.addf %68, %69 : vector<8x128xf32>
    %cst_30 = arith.constant 0.000000e+00 : f32
    %71 = vector.broadcast %cst_30 : f32 to vector<8x128xf32>
    %72 = arith.maximumf %70, %71 : vector<8x128xf32>
    %c0_31 = arith.constant 0 : index
    %c0_32 = arith.constant 0 : index
    %73 = vector.load %arg10[%c0_31, %c0_32] : memref<128x128xf32, #tpu.memory_space<vmem>>, vector<128x128xf32>
    %cst_33 = arith.constant dense<0.000000e+00> : vector<8x128xf32>
    %74 = tpu.matmul %72, %73, %cst_33 {dimension_numbers = #tpu.dot_dimension_numbers<[1], [0], [0], [1], [0, 0, 1, 1], [], []>} : vector<8x128xf32>, vector<128x128xf32>, vector<8x128xf32> -> vector<8x128xf32>
    %c0_34 = arith.constant 0 : index
    %c0_35 = arith.constant 0 : index
    %75 = vector.load %arg11[%c0_34, %c0_35] : memref<1x128xf32, #tpu.memory_space<vmem>>, vector<1x128xf32>
    %76 = vector.broadcast %75 : vector<1x128xf32> to vector<8x128xf32>
    %77 = arith.addf %74, %76 : vector<8x128xf32>
    %c0_36 = arith.constant 0 : index
    %c0_37 = arith.constant 0 : index
    %78 = vector.load %arg12[%c0_36, %c0_37] : memref<8x128xf32, #tpu.memory_space<vmem>>, vector<8x128xf32>
    tpu.vector_store %arg12[%c0_36, %c0_37], %77 {strides = array<i32>} : memref<8x128xf32, #tpu.memory_space<vmem>>, vector<8x128xf32>,
    return
  }
  func.func @transform_0(%arg0: i32) -> (i32, i32) {
    %c0_i32 = arith.constant 0 : i32
    %c0_i32_0 = arith.constant 0 : i32
    return %arg0, %c0_i32 : i32, i32
  }
  func.func @transform_1(%arg0: i32) -> (i32, i32) {
    %c0_i32 = arith.constant 0 : i32
    %c0_i32_0 = arith.constant 0 : i32
    %c0_i32_1 = arith.constant 0 : i32
    return %c0_i32, %c0_i32_0 : i32, i32
  }
  func.func @transform_2(%arg0: i32) -> (i32, i32) {
    %c0_i32 = arith.constant 0 : i32
    %c0_i32_0 = arith.constant 0 : i32
    %c0_i32_1 = arith.constant 0 : i32
    return %c0_i32, %c0_i32_0 : i32, i32
  }
  func.func @transform_3(%arg0: i32) -> (i32, i32) {
    %c0_i32 = arith.constant 0 : i32
    %c0_i32_0 = arith.constant 0 : i32
    %c0_i32_1 = arith.constant 0 : i32
    return %c0_i32, %c0_i32_0 : i32, i32
  }
  func.func @transform_4(%arg0: i32) -> (i32, i32) {
    %c0_i32 = arith.constant 0 : i32
    %c0_i32_0 = arith.constant 0 : i32
    %c0_i32_1 = arith.constant 0 : i32
    return %c0_i32, %c0_i32_0 : i32, i32
  }
  func.func @transform_5(%arg0: i32) -> (i32, i32) {
    %c0_i32 = arith.constant 0 : i32
    %c0_i32_0 = arith.constant 0 : i32
    %c0_i32_1 = arith.constant 0 : i32
    return %c0_i32, %c0_i32_0 : i32, i32
  }
  func.func @transform_6(%arg0: i32) -> (i32, i32) {
    %c0_i32 = arith.constant 0 : i32
    %c0_i32_0 = arith.constant 0 : i32
    %c0_i32_1 = arith.constant 0 : i32
    return %c0_i32, %c0_i32_0 : i32, i32
  }
  func.func @transform_7(%arg0: i32) -> (i32, i32) {
    %c0_i32 = arith.constant 0 : i32
    %c0_i32_0 = arith.constant 0 : i32
    %c0_i32_1 = arith.constant 0 : i32
    return %c0_i32, %c0_i32_0 : i32, i32
  }
  func.func @transform_8(%arg0: i32) -> (i32, i32) {
    %c0_i32 = arith.constant 0 : i32
    %c0_i32_0 = arith.constant 0 : i32
    %c0_i32_1 = arith.constant 0 : i32
    return %c0_i32, %c0_i32_0 : i32, i32
  }
  func.func @transform_9(%arg0: i32) -> (i32, i32) {
    %c0_i32 = arith.constant 0 : i32
    %c0_i32_0 = arith.constant 0 : i32
    %c0_i32_1 = arith.constant 0 : i32
    return %c0_i32, %c0_i32_0 : i32, i32
  }
  func.func @transform_10(%arg0: i32) -> (i32, i32) {
    %c0_i32 = arith.constant 0 : i32
    %c0_i32_0 = arith.constant 0 : i32
    %c0_i32_1 = arith.constant 0 : i32
    return %c0_i32, %c0_i32_0 : i32, i32
  }
  func.func @transform_11(%arg0: i32) -> (i32, i32) {
    %c0_i32 = arith.constant 0 : i32
    %c0_i32_0 = arith.constant 0 : i32
    return %arg0, %c0_i32 : i32, i32
  }
}

</mosaic_0001>

<llo_original>
// kernel: tpu_custom_call.1
$region0: #{tpu_custom_call.1}
  #allocation0 [shape = 'u32[]', space=smem, size = 0x4, offset = 0x4, fixed_abs, tag = 'smem constant byte address 0x4 - core index']
  #allocation1 [shape = 'u32[144,128]{1,0:T(1,128)}', space=vmem, size = 0x12000, scoped, tag = 'internal scratch']
  %s0 = inlined_call_operand.hbm [shape: f32[8,128], index: 0, kind: input, shape index: {}]
  %s1 = inlined_call_operand.hbm [shape: f32[128,128], index: 1, kind: input, shape index: {}]
  %s2 = inlined_call_operand.vmem [shape: f32[1,128], index: 2, kind: input, shape index: {}]
  %s3 = inlined_call_operand.vmem [shape: f32[1,128], index: 3, kind: input, shape index: {}]
  %s4 = inlined_call_operand.vmem [shape: f32[1,128], index: 4, kind: input, shape index: {}]
  %s5 = inlined_call_operand.hbm [shape: f32[128,128], index: 5, kind: input, shape index: {}]
  %s6 = inlined_call_operand.vmem [shape: f32[1,128], index: 6, kind: input, shape index: {}]
  %s7 = inlined_call_operand.vmem [shape: f32[1,128], index: 7, kind: input, shape index: {}]
  %s8 = inlined_call_operand.vmem [shape: f32[1,128], index: 8, kind: input, shape index: {}]
  %s9 = inlined_call_operand.hbm [shape: f32[128,128], index: 9, kind: input, shape index: {}]
  %s10 = inlined_call_operand.vmem [shape: f32[1,128], index: 10, kind: input, shape index: {}]
  %s11 = inlined_call_operand.hbm [shape: f32[8,128], index: 11, kind: output, shape index: {}]
  %s12 = sld [smem:[#allocation0]]
  $region70: #{tpu_custom_call.1} parent=0
    _
  %s14 = ssub.s32 1, %s12
  %s15 = scalar_select 0, %s14, %s12
  $region1: #{tpu_custom_call.1} parent=0
    #allocation2 [shape = 'u8[4096]{0}', space=vmem, size = 0x1000, scoped, tag = 'input window, operand 0, single buffered']
    #allocation3 [shape = 's32[1]{0}', space=sflag, size = 0x4, scoped, tag = 'scoped memory for tpu_custom_call.1']
    #allocation4 [shape = 's32[1]{0}', space=sflag, size = 0x4, scoped, tag = 'scoped memory for tpu_custom_call.1']
    #allocation5 [shape = 'u8[65536]{0}', space=vmem, size = 0x10000, scoped, tag = 'input window, operand 1, single buffered']
    #allocation6 [shape = 's32[1]{0}', space=sflag, size = 0x4, scoped, tag = 'scoped memory for tpu_custom_call.1']
    #allocation7 [shape = 'u8[65536]{0}', space=vmem, size = 0x10000, scoped, tag = 'input window, operand 5, single buffered']
    #allocation8 [shape = 'u8[65536]{0}', space=vmem, size = 0x10000, scoped, tag = 'input window, operand 9, single buffered']
    #allocation9 [shape = 's32[1]{0}', space=sflag, size = 0x4, scoped, tag = 'scoped memory for tpu_custom_call.1']
    #allocation10 [shape = 'u8[4096]{0}', space=vmem, size = 0x1000, scoped, tag = 'output window, operand 0, single buffered']
    %16 = vsyncpa [#allocation3], 0
    %17 = vsyncpa [#allocation6], 0
    %18 = vsyncpa [#allocation9], 0
    %19 = vsyncpa [#allocation4], 0
    // Predicated region
    $region2: #{tpu_custom_call.1} parent=1 // pred_check
      _
    $region3: #{tpu_custom_call.1} parent=1 // pred_check_branch
      %21 = sbr.rel (0) target = $region5
    $region4: #{tpu_custom_call.1} parent=1 // pred_region
      %s23 = ssub.s32 128, 128
      %24 = vsyncadd [#allocation3], %s23
      %s26 = sshll.u32 [#allocation2], 4
      %s27 = int_to_ptr.vmem [resolvable:$true] %s26
      %29 = dma.hbm_to_vmem [thread:$0]  %s0, 128, %s27, [#allocation3]
    $region5: #{tpu_custom_call.1} parent=1 // pred_fallthru
      _
    // Predicated region
    $region6: #{tpu_custom_call.1} parent=1 // pred_check
      _
    $region7: #{tpu_custom_call.1} parent=1 // pred_check_branch
      %31 = sbr.rel (0) target = $region9
    $region8: #{tpu_custom_call.1} parent=1 // pred_region
      %s33 = ssub.s32 2048, 2048
      %34 = vsyncadd [#allocation6], %s33
      %s35 = sshll.u32 [#allocation5], 4
      %s36 = int_to_ptr.vmem [resolvable:$true] %s35
      %41 = dma.hbm_to_vmem [thread:$0]  %s1, 2048, %s36, [#allocation6], 128, 128, 8
    $region9: #{tpu_custom_call.1} parent=1 // pred_fallthru
      _
    // Predicated region
    $region10: #{tpu_custom_call.1} parent=1 // pred_check
      _
    $region11: #{tpu_custom_call.1} parent=1 // pred_check_branch
      %43 = sbr.rel (0) target = $region13
    $region12: #{tpu_custom_call.1} parent=1 // pred_region
      _
    $region13: #{tpu_custom_call.1} parent=1 // pred_fallthru
      _
    // Predicated region
    $region14: #{tpu_custom_call.1} parent=1 // pred_check
      _
    $region15: #{tpu_custom_call.1} parent=1 // pred_check_branch
      %45 = sbr.rel (0) target = $region17
    $region16: #{tpu_custom_call.1} parent=1 // pred_region
      _
    $region17: #{tpu_custom_call.1} parent=1 // pred_fallthru
      _
    // Predicated region
    $region18: #{tpu_custom_call.1} parent=1 // pred_check
      _
    $region19: #{tpu_custom_call.1} parent=1 // pred_check_branch
      %47 = sbr.rel (0) target = $region21
    $region20: #{tpu_custom_call.1} parent=1 // pred_region
      _
    $region21: #{tpu_custom_call.1} parent=1 // pred_fallthru
      _
    // Predicated region
    $region22: #{tpu_custom_call.1} parent=1 // pred_check
      _
    $region23: #{tpu_custom_call.1} parent=1 // pred_check_branch
      %49 = sbr.rel (0) target = $region25
    $region24: #{tpu_custom_call.1} parent=1 // pred_region
      %s51 = ssub.s32 2048, 2048
      %52 = vsyncadd [#allocation6], %s51
      %s53 = sshll.u32 [#allocation7], 4
      %s54 = int_to_ptr.vmem [resolvable:$true] %s53
      %59 = dma.hbm_to_vmem [thread:$0]  %s5, 2048, %s54, [#allocation6], 128, 128, 8
    $region25: #{tpu_custom_call.1} parent=1 // pred_fallthru
      _
    // Predicated region
    $region26: #{tpu_custom_call.1} parent=1 // pred_check
      _
    $region27: #{tpu_custom_call.1} parent=1 // pred_check_branch
      %61 = sbr.rel (0) target = $region29
    $region28: #{tpu_custom_call.1} parent=1 // pred_region
      _
    $region29: #{tpu_custom_call.1} parent=1 // pred_fallthru
      _
    // Predicated region
    $region30: #{tpu_custom_call.1} parent=1 // pred_check
      _
    $region31: #{tpu_custom_call.1} parent=1 // pred_check_branch
      %63 = sbr.rel (0) target = $region33
    $region32: #{tpu_custom_call.1} parent=1 // pred_region
      _
    $region33: #{tpu_custom_call.1} parent=1 // pred_fallthru
      _
    // Predicated region
    $region34: #{tpu_custom_call.1} parent=1 // pred_check
      _
    $region35: #{tpu_custom_call.1} parent=1 // pred_check_branch
      %65 = sbr.rel (0) target = $region37
    $region36: #{tpu_custom_call.1} parent=1 // pred_region
      _
    $region37: #{tpu_custom_call.1} parent=1 // pred_fallthru
      _
    // Predicated region
    $region38: #{tpu_custom_call.1} parent=1 // pred_check
      _
    $region39: #{tpu_custom_call.1} parent=1 // pred_check_branch
      %67 = sbr.rel (0) target = $region41
    $region40: #{tpu_custom_call.1} parent=1 // pred_region
      %s69 = ssub.s32 2048, 2048
      %70 = vsyncadd [#allocation9], %s69
      %s71 = sshll.u32 [#allocation8], 4
      %s72 = int_to_ptr.vmem [resolvable:$true] %s71
      %77 = dma.hbm_to_vmem [thread:$0]  %s9, 2048, %s72, [#allocation9], 128, 128, 8
    $region41: #{tpu_custom_call.1} parent=1 // pred_fallthru
      _
    // Predicated region
    $region42: #{tpu_custom_call.1} parent=1 // pred_check
      _
    $region43: #{tpu_custom_call.1} parent=1 // pred_check_branch
      %79 = sbr.rel (0) target = $region45
    $region44: #{tpu_custom_call.1} parent=1 // pred_region
      _
    $region45: #{tpu_custom_call.1} parent=1 // pred_fallthru
      _
    // Predicated region
    $region46: #{tpu_custom_call.1} parent=1 // pred_check
      _
    $region47: #{tpu_custom_call.1} parent=1 // pred_check_branch
      %81 = sbr.rel (0) target = $region49
    $region48: #{tpu_custom_call.1} parent=1 // pred_region
      %82 = dma.done [#allocation3], 128
    $region49: #{tpu_custom_call.1} parent=1 // pred_fallthru
      _
    // Predicated region
    $region50: #{tpu_custom_call.1} parent=1 // pred_check
      _
    $region51: #{tpu_custom_call.1} parent=1 // pred_check_branch
      %84 = sbr.rel (0) target = $region53
    $region52: #{tpu_custom_call.1} parent=1 // pred_region
      %85 = dma.done [#allocation6], 2048
    $region53: #{tpu_custom_call.1} parent=1 // pred_fallthru
      _
    // Predicated region
    $region54: #{tpu_custom_call.1} parent=1 // pred_check
      _
    $region55: #{tpu_custom_call.1} parent=1 // pred_check_branch
      %87 = sbr.rel (0) target = $region57
    $region56: #{tpu_custom_call.1} parent=1 // pred_region
      %88 = dma.done [#allocation6], 2048
    $region57: #{tpu_custom_call.1} parent=1 // pred_fallthru
      _
    // Predicated region
    $region58: #{tpu_custom_call.1} parent=1 // pred_check
      _
    $region59: #{tpu_custom_call.1} parent=1 // pred_check_branch
      %90 = sbr.rel (0) target = $region61
    $region60: #{tpu_custom_call.1} parent=1 // pred_region
      %91 = dma.done [#allocation9], 2048
    $region61: #{tpu_custom_call.1} parent=1 // pred_fallthru
      _
    %v92 = vld [vmem:[#allocation2] sm:$0xff]
    %v93 = vld [vmem:[#allocation5] sm:$0xff]
    %v94 = vld [vmem:[#allocation5 + $0x8] sm:$0xff]
    %v95 = vld [vmem:[#allocation5 + $0x10] sm:$0xff]
    %v96 = vld [vmem:[#allocation5 + $0x18] sm:$0xff]
    %v97 = vld [vmem:[#allocation5 + $0x20] sm:$0xff]
    %v98 = vld [vmem:[#allocation5 + $0x28] sm:$0xff]
    %v99 = vld [vmem:[#allocation5 + $0x30] sm:$0xff]
    %v100 = vld [vmem:[#allocation5 + $0x38] sm:$0xff]
    %v101 = vld [vmem:[#allocation5 + $0x40] sm:$0xff]
    %v102 = vld [vmem:[#allocation5 + $0x48] sm:$0xff]
    %v103 = vld [vmem:[#allocation5 + $0x50] sm:$0xff]
    %v104 = vld [vmem:[#allocation5 + $0x58] sm:$0xff]
    %v105 = vld [vmem:[#allocation5 + $0x60] sm:$0xff]
    %v106 = vld [vmem:[#allocation5 + $0x68] sm:$0xff]
    %v107 = vld [vmem:[#allocation5 + $0x70] sm:$0xff]
    %v108 = vld [vmem:[#allocation5 + $0x78] sm:$0xff]
    %v109 = vld [vmem:[%s2] sm:$0x1]
    %v111 = vlaneseq
    %v112 = vshrl.u32 %v111, 7
    %v113 = vsub.s32 0, %v112
    %v114 = vrot.slane %v109, %v113
    %116 = vmatprep.subr.mxu0 0.0
    %117 = vmatpush1.msra.mxu0 %v108
    %118 = vmatprep.subr.mxu0 0.0
    %119 = vmatpush1.msra.mxu0 %v107
    %120 = vmatprep.subr.mxu0 0.0
    %121 = vmatpush1.msra.mxu0 %v106
    %122 = vmatprep.subr.mxu0 0.0
    %123 = vmatpush1.msra.mxu0 %v105
    %124 = vmatprep.subr.mxu0 0.0
    %125 = vmatpush1.msra.mxu0 %v104
    %126 = vmatprep.subr.mxu0 0.0
    %127 = vmatpush1.msra.mxu0 %v103
    %128 = vmatprep.subr.mxu0 0.0
    %129 = vmatpush1.msra.mxu0 %v102
    %130 = vmatprep.subr.mxu0 0.0
    %131 = vmatpush1.msra.mxu0 %v101
    %132 = vmatprep.subr.mxu0 0.0
    %133 = vmatpush1.msra.mxu0 %v100
    %134 = vmatprep.subr.mxu0 0.0
    %135 = vmatpush1.msra.mxu0 %v99
    %136 = vmatprep.subr.mxu0 0.0
    %137 = vmatpush1.msra.mxu0 %v98
    %138 = vmatprep.subr.mxu0 0.0
    %139 = vmatpush1.msra.mxu0 %v97
    %140 = vmatprep.subr.mxu0 0.0
    %141 = vmatpush1.msra.mxu0 %v96
    %142 = vmatprep.subr.mxu0 0.0
    %143 = vmatpush1.msra.mxu0 %v95
    %144 = vmatprep.subr.mxu0 0.0
    %145 = vmatpush1.msra.mxu0 %v94
    %146 = vmatprep.subr.mxu0 0.0
    %147 = vmatpush1.msra.mxu0 %v93
    %148 = vmatprep.subr.mxu0 0.0
    %149 = vmatpush2.msra.mxu0 0.0
    %150 = vmatprep.subr.mxu0 0.0
    %151 = vmatpush2.msra.mxu0 0.0
    %152 = vmatprep.subr.mxu0 0.0
    %153 = vmatpush2.msra.mxu0 0.0
    %154 = vmatprep.subr.mxu0 0.0
    %155 = vmatpush2.msra.mxu0 0.0
    %156 = vmatprep.subr.mxu0 0.0
    %157 = vmatpush2.msra.mxu0 0.0
    %158 = vmatprep.subr.mxu0 0.0
    %159 = vmatpush2.msra.mxu0 0.0
    %160 = vmatprep.subr.mxu0 0.0
    %161 = vmatpush2.msra.mxu0 0.0
    %162 = vmatprep.subr.mxu0 0.0
    %163 = vmatpush2.msra.mxu0 0.0
    %164 = vmatprep.subr.mxu0 0.0
    %165 = vmatpush2.msra.mxu0 0.0
    %166 = vmatprep.subr.mxu0 0.0
    %167 = vmatpush2.msra.mxu0 0.0
    %168 = vmatprep.subr.mxu0 0.0
    %169 = vmatpush2.msra.mxu0 0.0
    %170 = vmatprep.subr.mxu0 0.0
    %171 = vmatpush2.msra.mxu0 0.0
    %172 = vmatprep.subr.mxu0 0.0
    %173 = vmatpush2.msra.mxu0 0.0
    %174 = vmatprep.subr.mxu0 0.0
    %175 = vmatpush2.msra.mxu0 0.0
    %176 = vmatprep.subr.mxu0 0.0
    %177 = vmatpush2.msra.mxu0 0.0
    %178 = vmatprep.subr.mxu0 0.0
    %179 = vmatpush2.msra.mxu0 0.0
    %180 = vmatprep.mubr.f32.mxu0 0.0
    %181 = vmatmul.mubr.f32.gmra.mxu0 %v92
    %v182 = vpop.f32.mrf.mxu0
    %v183 = vadd.f32 %v114, %v182
    %v184 = vpop.f32.mrf.mxu0
    %185 = vdwg.mxu0
    %v186 = vld [vmem:[%s3] sm:$0x1]
    %v187 = vld [vmem:[%s4] sm:$0x1]
    %v188 = vlaneseq
    %v189 = vand.u32 %v188, 127
    %vm190 = vcmp.lt.s32.totalorder %v189, 32
    %v191 = vsel %vm190, 1, 0
    %v192 = vcvt.s32.f32 %v191
    %193 = vadd.xlane.f32.xlu0 %v183
    %v194 = vpop.xlane.xlu0 %193
    %v195 = vmul.f32 %v194, 0.03125
    %v196 = vsub.f32 %v183, %v195
    %v197 = vmul.f32 %v196, %v192
    %v198 = vmul.f32 %v197, %v197
    %199 = vadd.xlane.f32.xlu0 %v198
    %v200 = vpop.xlane.xlu0 %199
    %v201 = vmul.f32 %v200, 0.03125
    %v202 = vadd.f32 %v201, 1e-05
    %v203 = vrsqrt.pop %v202
    %v204 = vmul.f32 %v197, %v203
    %v206 = vlaneseq
    %v207 = vshrl.u32 %v206, 7
    %v208 = vsub.s32 0, %v207
    %v209 = vrot.slane %v186, %v208
    %v211 = vmul.f32 %v204, %v209
    %v213 = vlaneseq
    %v214 = vshrl.u32 %v213, 7
    %v215 = vsub.s32 0, %v214
    %v216 = vrot.slane %v187, %v215
    %v218 = vadd.f32 %v211, %v216
    %v219 = vmax.f32 %v218, 0.0
    %v220 = vld [vmem:[#allocation7] sm:$0xff]
    %v221 = vld [vmem:[#allocation7 + $0x8] sm:$0xff]
    %v222 = vld [vmem:[#allocation7 + $0x10] sm:$0xff]
    %v223 = vld [vmem:[#allocation7 + $0x18] sm:$0xff]
    %v224 = vld [vmem:[#allocation7 + $0x20] sm:$0xff]
    %v225 = vld [vmem:[#allocation7 + $0x28] sm:$0xff]
    %v226 = vld [vmem:[#allocation7 + $0x30] sm:$0xff]
    %v227 = vld [vmem:[#allocation7 + $0x38] sm:$0xff]
    %v228 = vld [vmem:[#allocation7 + $0x40] sm:$0xff]
    %v229 = vld [vmem:[#allocation7 + $0x48] sm:$0xff]
    %v230 = vld [vmem:[#allocation7 + $0x50] sm:$0xff]
    %v231 = vld [vmem:[#allocation7 + $0x58] sm:$0xff]
    %v232 = vld [vmem:[#allocation7 + $0x60] sm:$0xff]
    %v233 = vld [vmem:[#allocation7 + $0x68] sm:$0xff]
    %v234 = vld [vmem:[#allocation7 + $0x70] sm:$0xff]
    %v235 = vld [vmem:[#allocation7 + $0x78] sm:$0xff]
    %v236 = vld [vmem:[%s6] sm:$0x1]
    %v238 = vlaneseq
    %v239 = vshrl.u32 %v238, 7
    %v240 = vsub.s32 0, %v239
    %v241 = vrot.slane %v236, %v240
    %243 = vmatprep.subr.mxu0 0.0
    %244 = vmatpush1.msra.mxu0 %v235
    %245 = vmatprep.subr.mxu0 0.0
    %246 = vmatpush1.msra.mxu0 %v234
    %247 = vmatprep.subr.mxu0 0.0
    %248 = vmatpush1.msra.mxu0 %v233
    %249 = vmatprep.subr.mxu0 0.0
    %250 = vmatpush1.msra.mxu0 %v232
    %251 = vmatprep.subr.mxu0 0.0
    %252 = vmatpush1.msra.mxu0 %v231
    %253 = vmatprep.subr.mxu0 0.0
    %254 = vmatpush1.msra.mxu0 %v230
    %255 = vmatprep.subr.mxu0 0.0
    %256 = vmatpush1.msra.mxu0 %v229
    %257 = vmatprep.subr.mxu0 0.0
    %258 = vmatpush1.msra.mxu0 %v228
    %259 = vmatprep.subr.mxu0 0.0
    %260 = vmatpush1.msra.mxu0 %v227
    %261 = vmatprep.subr.mxu0 0.0
    %262 = vmatpush1.msra.mxu0 %v226
    %263 = vmatprep.subr.mxu0 0.0
    %264 = vmatpush1.msra.mxu0 %v225
    %265 = vmatprep.subr.mxu0 0.0
    %266 = vmatpush1.msra.mxu0 %v224
    %267 = vmatprep.subr.mxu0 0.0
    %268 = vmatpush1.msra.mxu0 %v223
    %269 = vmatprep.subr.mxu0 0.0
    %270 = vmatpush1.msra.mxu0 %v222
    %271 = vmatprep.subr.mxu0 0.0
    %272 = vmatpush1.msra.mxu0 %v221
    %273 = vmatprep.subr.mxu0 0.0
    %274 = vmatpush1.msra.mxu0 %v220
    %275 = vmatprep.subr.mxu0 0.0
    %276 = vmatpush2.msra.mxu0 0.0
    %277 = vmatprep.subr.mxu0 0.0
    %278 = vmatpush2.msra.mxu0 0.0
    %279 = vmatprep.subr.mxu0 0.0
    %280 = vmatpush2.msra.mxu0 0.0
    %281 = vmatprep.subr.mxu0 0.0
    %282 = vmatpush2.msra.mxu0 0.0
    %283 = vmatprep.subr.mxu0 0.0
    %284 = vmatpush2.msra.mxu0 0.0
    %285 = vmatprep.subr.mxu0 0.0
    %286 = vmatpush2.msra.mxu0 0.0
    %287 = vmatprep.subr.mxu0 0.0
    %288 = vmatpush2.msra.mxu0 0.0
    %289 = vmatprep.subr.mxu0 0.0
    %290 = vmatpush2.msra.mxu0 0.0
    %291 = vmatprep.subr.mxu0 0.0
    %292 = vmatpush2.msra.mxu0 0.0
    %293 = vmatprep.subr.mxu0 0.0
    %294 = vmatpush2.msra.mxu0 0.0
    %295 = vmatprep.subr.mxu0 0.0
    %296 = vmatpush2.msra.mxu0 0.0
    %297 = vmatprep.subr.mxu0 0.0
    %298 = vmatpush2.msra.mxu0 0.0
    %299 = vmatprep.subr.mxu0 0.0
    %300 = vmatpush2.msra.mxu0 0.0
    %301 = vmatprep.subr.mxu0 0.0
    %302 = vmatpush2.msra.mxu0 0.0
    %303 = vmatprep.subr.mxu0 0.0
    %304 = vmatpush2.msra.mxu0 0.0
    %305 = vmatprep.subr.mxu0 0.0
    %306 = vmatpush2.msra.mxu0 0.0
    %307 = vmatprep.mubr.f32.mxu0 0.0
    %308 = vmatmul.mubr.f32.gmra.mxu0 %v219
    %v309 = vpop.f32.mrf.mxu0
    %v310 = vadd.f32 %v241, %v309
    %v311 = vpop.f32.mrf.mxu0
    %312 = vdwg.mxu0
    %v313 = vld [vmem:[%s7] sm:$0x1]
    %v314 = vld [vmem:[%s8] sm:$0x1]
    %315 = vadd.xlane.f32.xlu0 %v310
    %v316 = vpop.xlane.xlu0 %315
    %v317 = vmul.f32 %v316, 0.03125
    %v318 = vsub.f32 %v310, %v317
    %v319 = vmul.f32 %v318, %v192
    %v320 = vmul.f32 %v319, %v319
    %321 = vadd.xlane.f32.xlu0 %v320
    %v322 = vpop.xlane.xlu0 %321
    %v323 = vmul.f32 %v322, 0.03125
    %v324 = vadd.f32 %v323, 1e-05
    %v325 = vrsqrt.pop %v324
    %v326 = vmul.f32 %v319, %v325
    %v328 = vlaneseq
    %v329 = vshrl.u32 %v328, 7
    %v330 = vsub.s32 0, %v329
    %v331 = vrot.slane %v313, %v330
    %v333 = vmul.f32 %v326, %v331
    %v335 = vlaneseq
    %v336 = vshrl.u32 %v335, 7
    %v337 = vsub.s32 0, %v336
    %v338 = vrot.slane %v314, %v337
    %v340 = vadd.f32 %v333, %v338
    %v341 = vmax.f32 %v340, 0.0
    %v342 = vld [vmem:[#allocation8] sm:$0xff]
    %v343 = vld [vmem:[#allocation8 + $0x8] sm:$0xff]
    %v344 = vld [vmem:[#allocation8 + $0x10] sm:$0xff]
    %v345 = vld [vmem:[#allocation8 + $0x18] sm:$0xff]
    %v346 = vld [vmem:[#allocation8 + $0x20] sm:$0xff]
    %v347 = vld [vmem:[#allocation8 + $0x28] sm:$0xff]
    %v348 = vld [vmem:[#allocation8 + $0x30] sm:$0xff]
    %v349 = vld [vmem:[#allocation8 + $0x38] sm:$0xff]
    %v350 = vld [vmem:[#allocation8 + $0x40] sm:$0xff]
    %v351 = vld [vmem:[#allocation8 + $0x48] sm:$0xff]
    %v352 = vld [vmem:[#allocation8 + $0x50] sm:$0xff]
    %v353 = vld [vmem:[#allocation8 + $0x58] sm:$0xff]
    %v354 = vld [vmem:[#allocation8 + $0x60] sm:$0xff]
    %v355 = vld [vmem:[#allocation8 + $0x68] sm:$0xff]
    %v356 = vld [vmem:[#allocation8 + $0x70] sm:$0xff]
    %v357 = vld [vmem:[#allocation8 + $0x78] sm:$0xff]
    %v358 = vld [vmem:[%s10] sm:$0x1]
    %v360 = vlaneseq
    %v361 = vshrl.u32 %v360, 7
    %v362 = vsub.s32 0, %v361
    %v363 = vrot.slane %v358, %v362
    %365 = vmatprep.subr.mxu0 0.0
    %366 = vmatpush1.msra.mxu0 %v357
    %367 = vmatprep.subr.mxu0 0.0
    %368 = vmatpush1.msra.mxu0 %v356
    %369 = vmatprep.subr.mxu0 0.0
    %370 = vmatpush1.msra.mxu0 %v355
    %371 = vmatprep.subr.mxu0 0.0
    %372 = vmatpush1.msra.mxu0 %v354
    %373 = vmatprep.subr.mxu0 0.0
    %374 = vmatpush1.msra.mxu0 %v353
    %375 = vmatprep.subr.mxu0 0.0
    %376 = vmatpush1.msra.mxu0 %v352
    %377 = vmatprep.subr.mxu0 0.0
    %378 = vmatpush1.msra.mxu0 %v351
    %379 = vmatprep.subr.mxu0 0.0
    %380 = vmatpush1.msra.mxu0 %v350
    %381 = vmatprep.subr.mxu0 0.0
    %382 = vmatpush1.msra.mxu0 %v349
    %383 = vmatprep.subr.mxu0 0.0
    %384 = vmatpush1.msra.mxu0 %v348
    %385 = vmatprep.subr.mxu0 0.0
    %386 = vmatpush1.msra.mxu0 %v347
    %387 = vmatprep.subr.mxu0 0.0
    %388 = vmatpush1.msra.mxu0 %v346
    %389 = vmatprep.subr.mxu0 0.0
    %390 = vmatpush1.msra.mxu0 %v345
    %391 = vmatprep.subr.mxu0 0.0
    %392 = vmatpush1.msra.mxu0 %v344
    %393 = vmatprep.subr.mxu0 0.0
    %394 = vmatpush1.msra.mxu0 %v343
    %395 = vmatprep.subr.mxu0 0.0
    %396 = vmatpush1.msra.mxu0 %v342
    %397 = vmatprep.subr.mxu0 0.0
    %398 = vmatpush2.msra.mxu0 0.0
    %399 = vmatprep.subr.mxu0 0.0
    %400 = vmatpush2.msra.mxu0 0.0
    %401 = vmatprep.subr.mxu0 0.0
    %402 = vmatpush2.msra.mxu0 0.0
    %403 = vmatprep.subr.mxu0 0.0
    %404 = vmatpush2.msra.mxu0 0.0
    %405 = vmatprep.subr.mxu0 0.0
    %406 = vmatpush2.msra.mxu0 0.0
    %407 = vmatprep.subr.mxu0 0.0
    %408 = vmatpush2.msra.mxu0 0.0
    %409 = vmatprep.subr.mxu0 0.0
    %410 = vmatpush2.msra.mxu0 0.0
    %411 = vmatprep.subr.mxu0 0.0
    %412 = vmatpush2.msra.mxu0 0.0
    %413 = vmatprep.subr.mxu0 0.0
    %414 = vmatpush2.msra.mxu0 0.0
    %415 = vmatprep.subr.mxu0 0.0
    %416 = vmatpush2.msra.mxu0 0.0
    %417 = vmatprep.subr.mxu0 0.0
    %418 = vmatpush2.msra.mxu0 0.0
    %419 = vmatprep.subr.mxu0 0.0
    %420 = vmatpush2.msra.mxu0 0.0
    %421 = vmatprep.subr.mxu0 0.0
    %422 = vmatpush2.msra.mxu0 0.0
    %423 = vmatprep.subr.mxu0 0.0
    %424 = vmatpush2.msra.mxu0 0.0
    %425 = vmatprep.subr.mxu0 0.0
    %426 = vmatpush2.msra.mxu0 0.0
    %427 = vmatprep.subr.mxu0 0.0
    %428 = vmatpush2.msra.mxu0 0.0
    %429 = vmatprep.mubr.f32.mxu0 0.0
    %430 = vmatmul.mubr.f32.gmra.mxu0 %v341
    %v431 = vpop.f32.mrf.mxu0
    %v432 = vadd.f32 %v363, %v431
    %v433 = vpop.f32.mrf.mxu0
    %434 = vdwg.mxu0
    %435 = vst [vmem:[#allocation10] sm:$0xff] %v432
    // Predicated region
    $region62: #{tpu_custom_call.1} parent=1 // pred_check
      _
    $region63: #{tpu_custom_call.1} parent=1 // pred_check_branch
      %437 = sbr.rel (0) target = $region65
    $region64: #{tpu_custom_call.1} parent=1 // pred_region
      %s439 = ssub.s32 128, 128
      %440 = vsyncadd [#allocation4], %s439
      %s442 = sshll.u32 [#allocation10], 4
      %s443 = int_to_ptr.vmem [resolvable:$true] %s442
      %445 = dma.vmem_to_hbm [thread:$0]  %s443, 128, %s11, [#allocation4]
    $region65: #{tpu_custom_call.1} parent=1 // pred_fallthru
      _
    // Predicated region
    $region66: #{tpu_custom_call.1} parent=1 // pred_check
      _
    $region67: #{tpu_custom_call.1} parent=1 // pred_check_branch
      %447 = sbr.rel (0) target = $region69
    $region68: #{tpu_custom_call.1} parent=1 // pred_region
      %448 = dma.done [#allocation4], 128
    $region69: #{tpu_custom_call.1} parent=1 // pred_fallthru
      _
    %449 = vsyncpa [#allocation3], 1
    %450 = vsyncpa [#allocation6], 1
    %451 = vsyncpa [#allocation9], 1
    %452 = vsyncpa [#allocation4], 1

</llo_original>
